<compile_context>
chip_gen: v7x
topology: tpu7x:2x2x1
jax: 0.10.0
libtpu: 0.0.40
codegen_flags: <defaults>
</compile_context>

<pallas_src>
import math
import functools

import jax
import jax.numpy as jnp
from jax.experimental import pallas as pl
from jax.experimental.pallas import tpu as pltpu


def _mqa_kernel(xq_ref, xkv_ref, wq_ref, wk_ref, wv_ref, wo_ref, o_ref,
                k_scr, v_scr, *, num_heads, head_dim):
    # xq_ref block: (1, Tq, D) query rows; xkv_ref block: (1, S, D) full seq.
    qi = pl.program_id(1)

    # --- K/V projection once per batch element (shared by all heads: MQA). --
    @pl.when(qi == 0)
    def _():
        xkv = xkv_ref[0]                                            # (S, D) bf16
        k_scr[...] = jnp.dot(xkv, wk_ref[...],
                             preferred_element_type=jnp.float32
                             ).astype(jnp.bfloat16)                 # (S, hd)
        v_scr[...] = jnp.dot(xkv, wv_ref[...],
                             preferred_element_type=jnp.float32
                             ).astype(jnp.bfloat16)                 # (S, hd)

    xq = xq_ref[0]                                                  # (Tq, D) bf16
    tq = xq.shape[0]
    d_model = wo_ref.shape[1]
    scale = 1.0 / math.sqrt(head_dim)

    # --- Q projection: bf16 inputs, fp32 accumulation on the MXU. ----------
    q = jnp.dot(xq, wq_ref[...], preferred_element_type=jnp.float32)   # (Tq, D)
    q = (q * scale).astype(jnp.bfloat16)        # fold softmax scale in once

    k = k_scr[...]                                                  # (S, hd) bf16
    v = v_scr[...]                                                  # (S, hd) bf16

    # --- Per-head scores / softmax / context, fused into the output proj. --
    acc = jnp.zeros((tq, d_model), jnp.float32)
    for h in range(num_heads):                  # static unroll (trace time)
        lo = h * head_dim
        q_h = q[:, lo:lo + head_dim]                                # (Tq, hd)
        # scores = q_h @ k^T without materializing a transposed K.
        s = jax.lax.dot_general(q_h, k, (((1,), (1,)), ((), ())),
                                preferred_element_type=jnp.float32)  # (Tq, S)
        m = jnp.max(s, axis=-1, keepdims=True)
        p = jnp.exp(s - m)
        denom = jnp.sum(p, axis=-1, keepdims=True)
        p = (p * pl.reciprocal(denom, approx=True)).astype(jnp.bfloat16)
        ctx_h = jnp.dot(p, v,
                        preferred_element_type=jnp.float32
                        ).astype(jnp.bfloat16)                       # (Tq, hd)
        # Fold this head straight into the output projection (no concat).
        acc = acc + jnp.dot(ctx_h, wo_ref[lo:lo + head_dim, :],
                            preferred_element_type=jnp.float32)      # (Tq, D)

    o_ref[0] = acc.astype(o_ref.dtype)


def _pick_q_tile(seq_len):
    # Prefer large query tiles (amortize per-grid-step overhead); fall back to
    # the full sequence when it is small / not tile-divisible.
    # TODO(synk): gate tile size on pltpu.get_tpu_info() (smaller on v7x's
    # 64 MiB VMEM) and stream Wq/Wo from HBM for very large d_model.
    for t in (512, 256, 128):
        if seq_len % t == 0:
            return t
    return seq_len


def multi_query_attention(x, wq_t, wk_t, wv_t, wo_t, *, num_heads):
    """x: [B, S, D]; w*_t: [in, out] (already transposed nn.Linear weights)."""
    B, S, D = x.shape
    head_dim = D // num_heads
    kv_dim = head_dim  # num_kv_heads = 1 (MQA)
    assert wq_t.shape == (D, D) and wo_t.shape == (D, D)
    assert wk_t.shape == (D, kv_dim) and wv_t.shape == (D, kv_dim)

    tq = _pick_q_tile(S)
    n_q = S // tq

    # bf16 operands for the MXU; accumulation stays fp32 inside the kernel.
    xb = x.astype(jnp.bfloat16)
    wq_b = wq_t.astype(jnp.bfloat16)
    wk_b = wk_t.astype(jnp.bfloat16)
    wv_b = wv_t.astype(jnp.bfloat16)
    wo_b = wo_t.astype(jnp.bfloat16)

    kernel = functools.partial(_mqa_kernel, num_heads=num_heads,
                               head_dim=head_dim)

    return pl.pallas_call(
        kernel,
        out_shape=jax.ShapeDtypeStruct((B, S, D), x.dtype),
        grid_spec=pltpu.PrefetchScalarGridSpec(
            num_scalar_prefetch=0,
            grid=(B, n_q),
            in_specs=[
                pl.BlockSpec((1, tq, D), lambda b, qi: (b, qi, 0)),   # x (query rows)
                pl.BlockSpec((1, S, D), lambda b, qi: (b, 0, 0)),     # x (full, for K/V)
                pl.BlockSpec((D, D), lambda b, qi: (0, 0)),           # W_q^T (resident)
                pl.BlockSpec((D, kv_dim), lambda b, qi: (0, 0)),      # W_k^T (resident)
                pl.BlockSpec((D, kv_dim), lambda b, qi: (0, 0)),      # W_v^T (resident)
                pl.BlockSpec((D, D), lambda b, qi: (0, 0)),           # W_o^T (resident)
            ],
            out_specs=pl.BlockSpec((1, tq, D), lambda b, qi: (b, qi, 0)),
            scratch_shapes=[
                pltpu.VMEM((S, kv_dim), jnp.bfloat16),   # K (per-batch carry)
                pltpu.VMEM((S, kv_dim), jnp.bfloat16),   # V (per-batch carry)
            ],
        ),
        compiler_params=pltpu.CompilerParams(
            dimension_semantics=("parallel", "arbitrary"),
            vmem_limit_bytes=48 * 1024 * 1024),
    )(xb, xb, wq_b, wk_b, wv_b, wo_b)


def _reference(x, wq_t, wk_t, wv_t, wo_t, num_heads):
    """Pure-JAX fp32 reference matching the PyTorch forward (eval mode)."""
    B, S, D = x.shape
    hd = D // num_heads
    q = x @ wq_t                       # (B, S, D)
    k = x @ wk_t                       # (B, S, hd)
    v = x @ wv_t                       # (B, S, hd)
    q = q.reshape(B, S, num_heads, hd).transpose(0, 2, 1, 3)     # (B, H, S, hd)
    k = k[:, None, :, :]                                         # (B, 1, S, hd)
    v = v[:, None, :, :]
    scores = jnp.einsum("bhqd,bhkd->bhqk", q, jnp.broadcast_to(k, q.shape))
    scores = scores / math.sqrt(hd)
    attn = jax.nn.softmax(scores, axis=-1)
    ctx = jnp.einsum("bhqk,bhkd->bhqd", attn, jnp.broadcast_to(v, q.shape))
    ctx = ctx.transpose(0, 2, 1, 3).reshape(B, S, D)
    return ctx @ wo_t


if __name__ == "__main__":
    # Small shapes consistent with the module.
    B, S, d_model, num_heads = 2, 8, 32, 4
    head_dim = d_model // num_heads     # 8
    kv_dim = head_dim                   # num_kv_heads = 1

    key = jax.random.PRNGKey(0)
    kx, kq, kk, kv_, ko = jax.random.split(key, 5)

    x = jax.random.normal(kx, (B, S, d_model), dtype=jnp.float32)

    # Deterministic "nn.Linear"-style weights; stored pre-transposed [in, out].
    def init_w(k, fan_in, fan_out):
        bound = 1.0 / math.sqrt(fan_in)
        return jax.random.uniform(k, (fan_in, fan_out),
                                  minval=-bound, maxval=bound,
                                  dtype=jnp.float32)

    wq_t = init_w(kq, d_model, d_model)
    wk_t = init_w(kk, d_model, kv_dim)
    wv_t = init_w(kv_, d_model, kv_dim)
    wo_t = init_w(ko, d_model, d_model)

    out = multi_query_attention(x, wq_t, wk_t, wv_t, wo_t,
                                num_heads=num_heads)
    out = jax.block_until_ready(out)

    ref = _reference(x, wq_t, wk_t, wv_t, wo_t, num_heads)
    assert out.shape == (B, S, d_model)
    # bf16 MXU inputs (kernel) vs fp32 reference -> loose but meaningful tol.
    assert jnp.allclose(out, ref, atol=5e-2, rtol=5e-2), "mismatch vs reference"

    print("KERNEL_OK")
</pallas_src>

<mosaic_0001>
module attributes {stable_mosaic.version = 11 : i64} {
  func.func @_mqa_kernel(%arg0: i32, %arg1: i32, %arg2: memref<1x8x32xbf16, #tpu.memory_space<vmem>>, %arg3: memref<1x8x32xbf16, #tpu.memory_space<vmem>>, %arg4: memref<32x32xbf16, #tpu.memory_space<vmem>>, %arg5: memref<32x8xbf16, #tpu.memory_space<vmem>>, %arg6: memref<32x8xbf16, #tpu.memory_space<vmem>>, %arg7: memref<32x32xbf16, #tpu.memory_space<vmem>>, %arg8: memref<1x8x32xf32, #tpu.memory_space<vmem>>, %arg9: memref<8x8xbf16, #tpu.memory_space<vmem>>, %arg10: memref<8x8xbf16, #tpu.memory_space<vmem>>) attributes {dimension_semantics = [#tpu.dimension_semantics<parallel>, #tpu.dimension_semantics<arbitrary>], iteration_bounds = array<i64: 2, 1>, scalar_prefetch = 0 : i64, scratch_operands = 2 : i64, tpu.core_type = #tpu.core_type<tc>, window_params = [{transform_indices = @transform_0, window_bounds = array<i64: 1, 8, 32>}, {transform_indices = @transform_1, window_bounds = array<i64: 1, 8, 32>}, {pipeline_mode = #tpu.pipeline_mode<synchronous>, transform_indices = @transform_2, window_bounds = array<i64: 32, 32>}, {pipeline_mode = #tpu.pipeline_mode<synchronous>, transform_indices = @transform_3, window_bounds = array<i64: 32, 8>}, {pipeline_mode = #tpu.pipeline_mode<synchronous>, transform_indices = @transform_4, window_bounds = array<i64: 32, 8>}, {pipeline_mode = #tpu.pipeline_mode<synchronous>, transform_indices = @transform_5, window_bounds = array<i64: 32, 32>}, {transform_indices = @transform_6, window_bounds = array<i64: 1, 8, 32>}]} {
    %c0_i32 = arith.constant 0 : i32
    %0 = arith.cmpi eq, %arg1, %c0_i32 : i32
    %1 = arith.extui %0 : i1 to i32
    %c0_i32_0 = arith.constant 0 : i32
    %2 = arith.cmpi ne, %1, %c0_i32_0 : i32
    scf.if %2 {
      %c0_39 = arith.constant 0 : index
      %c0_40 = arith.constant 0 : index
      %c0_41 = arith.constant 0 : index
      %88 = vector.load %arg3[%c0_39, %c0_40, %c0_41] : memref<1x8x32xbf16, #tpu.memory_space<vmem>>, vector<1x8x32xbf16>
      %89 = vector.shape_cast %88 : vector<1x8x32xbf16> to vector<8x32xbf16>
      %c0_42 = arith.constant 0 : index
      %c0_43 = arith.constant 0 : index
      %90 = vector.load %arg5[%c0_42, %c0_43] : memref<32x8xbf16, #tpu.memory_space<vmem>>, vector<32x8xbf16>
      %cst_44 = arith.constant dense<0.000000e+00> : vector<8x8xf32>
      %91 = tpu.matmul %89, %90, %cst_44 {dimension_numbers = #tpu.dot_dimension_numbers<[1], [0], [0], [1], [0, 0, 1, 1], [], []>} : vector<8x32xbf16>, vector<32x8xbf16>, vector<8x8xf32> -> vector<8x8xf32>
      %92 = arith.truncf %91 : vector<8x8xf32> to vector<8x8xbf16>
      %c0_45 = arith.constant 0 : index
      %c0_46 = arith.constant 0 : index
      %93 = vector.load %arg9[%c0_45, %c0_46] : memref<8x8xbf16, #tpu.memory_space<vmem>>, vector<8x8xbf16>
      tpu.vector_store %arg9[%c0_45, %c0_46], %92 {strides = array<i32>} : memref<8x8xbf16, #tpu.memory_space<vmem>>, vector<8x8xbf16>,
      %c0_47 = arith.constant 0 : index
      %c0_48 = arith.constant 0 : index
      %94 = vector.load %arg6[%c0_47, %c0_48] : memref<32x8xbf16, #tpu.memory_space<vmem>>, vector<32x8xbf16>
      %cst_49 = arith.constant dense<0.000000e+00> : vector<8x8xf32>
      %95 = tpu.matmul %89, %94, %cst_49 {dimension_numbers = #tpu.dot_dimension_numbers<[1], [0], [0], [1], [0, 0, 1, 1], [], []>} : vector<8x32xbf16>, vector<32x8xbf16>, vector<8x8xf32> -> vector<8x8xf32>
      %96 = arith.truncf %95 : vector<8x8xf32> to vector<8x8xbf16>
      %c0_50 = arith.constant 0 : index
      %c0_51 = arith.constant 0 : index
      %97 = vector.load %arg10[%c0_50, %c0_51] : memref<8x8xbf16, #tpu.memory_space<vmem>>, vector<8x8xbf16>
      tpu.vector_store %arg10[%c0_50, %c0_51], %96 {strides = array<i32>} : memref<8x8xbf16, #tpu.memory_space<vmem>>, vector<8x8xbf16>,
    } else {
    }
    %c0 = arith.constant 0 : index
    %c0_1 = arith.constant 0 : index
    %c0_2 = arith.constant 0 : index
    %3 = vector.load %arg2[%c0, %c0_1, %c0_2] : memref<1x8x32xbf16, #tpu.memory_space<vmem>>, vector<1x8x32xbf16>
    %4 = vector.shape_cast %3 : vector<1x8x32xbf16> to vector<8x32xbf16>
    %c0_3 = arith.constant 0 : index
    %c0_4 = arith.constant 0 : index
    %5 = vector.load %arg4[%c0_3, %c0_4] : memref<32x32xbf16, #tpu.memory_space<vmem>>, vector<32x32xbf16>
    %cst = arith.constant dense<0.000000e+00> : vector<8x32xf32>
    %6 = tpu.matmul %4, %5, %cst {dimension_numbers = #tpu.dot_dimension_numbers<[1], [0], [0], [1], [0, 0, 1, 1], [], []>} : vector<8x32xbf16>, vector<32x32xbf16>, vector<8x32xf32> -> vector<8x32xf32>
    %cst_5 = arith.constant 0.353553385 : f32
    %7 = vector.broadcast %cst_5 : f32 to vector<8x32xf32>
    %8 = arith.mulf %6, %7 : vector<8x32xf32>
    %9 = arith.truncf %8 : vector<8x32xf32> to vector<8x32xbf16>
    %c0_6 = arith.constant 0 : index
    %c0_7 = arith.constant 0 : index
    %10 = vector.load %arg9[%c0_6, %c0_7] : memref<8x8xbf16, #tpu.memory_space<vmem>>, vector<8x8xbf16>
    %c0_8 = arith.constant 0 : index
    %c0_9 = arith.constant 0 : index
    %11 = vector.load %arg10[%c0_8, %c0_9] : memref<8x8xbf16, #tpu.memory_space<vmem>>, vector<8x8xbf16>
    %cst_10 = arith.constant 0.000000e+00 : f32
    %12 = vector.broadcast %cst_10 : f32 to vector<8x32xf32>
    %13 = vector.extract_strided_slice %9 {offsets = [0, 0], sizes = [8, 8], strides = [1, 1]} : vector<8x32xbf16> to vector<8x8xbf16>
    %cst_11 = arith.constant dense<0.000000e+00> : vector<8x8xf32>
    %14 = tpu.matmul %13, %10, %cst_11 {dimension_numbers = #tpu.dot_dimension_numbers<[1], [1], [0], [0], [0, 0, 1, 0], [], []>} : vector<8x8xbf16>, vector<8x8xbf16>, vector<8x8xf32> -> vector<8x8xf32>
    %cst_12 = arith.constant dense<0xFF800000> : vector<8xf32>
    %15 = vector.multi_reduction <maximumf>, %14, %cst_12 [1] : vector<8x8xf32> to vector<8xf32>
    %16 = vector.shape_cast %15 : vector<8xf32> to vector<8x1xf32>
    %17 = vector.broadcast %16 : vector<8x1xf32> to vector<8x8xf32>
    %18 = arith.subf %14, %17 : vector<8x8xf32>
    %19 = math.exp %18 : vector<8x8xf32>
    %cst_13 = arith.constant dense<0.000000e+00> : vector<8xf32>
    %20 = vector.multi_reduction <add>, %19, %cst_13 [1] : vector<8x8xf32> to vector<8xf32>
    %21 = vector.shape_cast %20 : vector<8xf32> to vector<8x1xf32>
    %22 = tpu.reciprocal %21 {approx = true} : vector<8x1xf32> -> vector<8x1xf32>
    %23 = vector.broadcast %22 : vector<8x1xf32> to vector<8x8xf32>
    %24 = arith.mulf %19, %23 : vector<8x8xf32>
    %25 = arith.truncf %24 : vector<8x8xf32> to vector<8x8xbf16>
    %cst_14 = arith.constant dense<0.000000e+00> : vector<8x8xf32>
    %26 = tpu.matmul %25, %11, %cst_14 {dimension_numbers = #tpu.dot_dimension_numbers<[1], [0], [0], [1], [0, 0, 1, 1], [], []>} : vector<8x8xbf16>, vector<8x8xbf16>, vector<8x8xf32> -> vector<8x8xf32>
    %27 = arith.truncf %26 : vector<8x8xf32> to vector<8x8xbf16>
    %c0_15 = arith.constant 0 : index
    %c0_16 = arith.constant 0 : index
    %28 = vector.load %arg7[%c0_15, %c0_16] : memref<32x32xbf16, #tpu.memory_space<vmem>>, vector<8x32xbf16>
    %cst_17 = arith.constant dense<0.000000e+00> : vector<8x32xf32>
    %29 = tpu.matmul %27, %28, %cst_17 {dimension_numbers = #tpu.dot_dimension_numbers<[1], [0], [0], [1], [0, 0, 1, 1], [], []>} : vector<8x8xbf16>, vector<8x32xbf16>, vector<8x32xf32> -> vector<8x32xf32>
    %30 = arith.addf %12, %29 : vector<8x32xf32>
    %31 = vector.extract_strided_slice %9 {offsets = [0, 8], sizes = [8, 8], strides = [1, 1]} : vector<8x32xbf16> to vector<8x8xbf16>
    %cst_18 = arith.constant dense<0.000000e+00> : vector<8x8xf32>
    %32 = tpu.matmul %31, %10, %cst_18 {dimension_numbers = #tpu.dot_dimension_numbers<[1], [1], [0], [0], [0, 0, 1, 0], [], []>} : vector<8x8xbf16>, vector<8x8xbf16>, vector<8x8xf32> -> vector<8x8xf32>
    %cst_19 = arith.constant dense<0xFF800000> : vector<8xf32>
    %33 = vector.multi_reduction <maximumf>, %32, %cst_19 [1] : vector<8x8xf32> to vector<8xf32>
    %34 = vector.shape_cast %33 : vector<8xf32> to vector<8x1xf32>
    %35 = vector.broadcast %34 : vector<8x1xf32> to vector<8x8xf32>
    %36 = arith.subf %32, %35 : vector<8x8xf32>
    %37 = math.exp %36 : vector<8x8xf32>
    %cst_20 = arith.constant dense<0.000000e+00> : vector<8xf32>
    %38 = vector.multi_reduction <add>, %37, %cst_20 [1] : vector<8x8xf32> to vector<8xf32>
    %39 = vector.shape_cast %38 : vector<8xf32> to vector<8x1xf32>
    %40 = tpu.reciprocal %39 {approx = true} : vector<8x1xf32> -> vector<8x1xf32>
    %41 = vector.broadcast %40 : vector<8x1xf32> to vector<8x8xf32>
    %42 = arith.mulf %37, %41 : vector<8x8xf32>
    %43 = arith.truncf %42 : vector<8x8xf32> to vector<8x8xbf16>
    %cst_21 = arith.constant dense<0.000000e+00> : vector<8x8xf32>
    %44 = tpu.matmul %43, %11, %cst_21 {dimension_numbers = #tpu.dot_dimension_numbers<[1], [0], [0], [1], [0, 0, 1, 1], [], []>} : vector<8x8xbf16>, vector<8x8xbf16>, vector<8x8xf32> -> vector<8x8xf32>
    %45 = arith.truncf %44 : vector<8x8xf32> to vector<8x8xbf16>
    %c8 = arith.constant 8 : index
    %c0_22 = arith.constant 0 : index
    %46 = vector.load %arg7[%c8, %c0_22] : memref<32x32xbf16, #tpu.memory_space<vmem>>, vector<8x32xbf16>
    %cst_23 = arith.constant dense<0.000000e+00> : vector<8x32xf32>
    %47 = tpu.matmul %45, %46, %cst_23 {dimension_numbers = #tpu.dot_dimension_numbers<[1], [0], [0], [1], [0, 0, 1, 1], [], []>} : vector<8x8xbf16>, vector<8x32xbf16>, vector<8x32xf32> -> vector<8x32xf32>
    %48 = arith.addf %30, %47 : vector<8x32xf32>
    %49 = vector.extract_strided_slice %9 {offsets = [0, 16], sizes = [8, 8], strides = [1, 1]} : vector<8x32xbf16> to vector<8x8xbf16>
    %cst_24 = arith.constant dense<0.000000e+00> : vector<8x8xf32>
    %50 = tpu.matmul %49, %10, %cst_24 {dimension_numbers = #tpu.dot_dimension_numbers<[1], [1], [0], [0], [0, 0, 1, 0], [], []>} : vector<8x8xbf16>, vector<8x8xbf16>, vector<8x8xf32> -> vector<8x8xf32>
    %cst_25 = arith.constant dense<0xFF800000> : vector<8xf32>
    %51 = vector.multi_reduction <maximumf>, %50, %cst_25 [1] : vector<8x8xf32> to vector<8xf32>
    %52 = vector.shape_cast %51 : vector<8xf32> to vector<8x1xf32>
    %53 = vector.broadcast %52 : vector<8x1xf32> to vector<8x8xf32>
    %54 = arith.subf %50, %53 : vector<8x8xf32>
    %55 = math.exp %54 : vector<8x8xf32>
    %cst_26 = arith.constant dense<0.000000e+00> : vector<8xf32>
    %56 = vector.multi_reduction <add>, %55, %cst_26 [1] : vector<8x8xf32> to vector<8xf32>
    %57 = vector.shape_cast %56 : vector<8xf32> to vector<8x1xf32>
    %58 = tpu.reciprocal %57 {approx = true} : vector<8x1xf32> -> vector<8x1xf32>
    %59 = vector.broadcast %58 : vector<8x1xf32> to vector<8x8xf32>
    %60 = arith.mulf %55, %59 : vector<8x8xf32>
    %61 = arith.truncf %60 : vector<8x8xf32> to vector<8x8xbf16>
    %cst_27 = arith.constant dense<0.000000e+00> : vector<8x8xf32>
    %62 = tpu.matmul %61, %11, %cst_27 {dimension_numbers = #tpu.dot_dimension_numbers<[1], [0], [0], [1], [0, 0, 1, 1], [], []>} : vector<8x8xbf16>, vector<8x8xbf16>, vector<8x8xf32> -> vector<8x8xf32>
    %63 = arith.truncf %62 : vector<8x8xf32> to vector<8x8xbf16>
    %c16 = arith.constant 16 : index
    %c0_28 = arith.constant 0 : index
    %64 = vector.load %arg7[%c16, %c0_28] : memref<32x32xbf16, #tpu.memory_space<vmem>>, vector<8x32xbf16>
    %cst_29 = arith.constant dense<0.000000e+00> : vector<8x32xf32>
    %65 = tpu.matmul %63, %64, %cst_29 {dimension_numbers = #tpu.dot_dimension_numbers<[1], [0], [0], [1], [0, 0, 1, 1], [], []>} : vector<8x8xbf16>, vector<8x32xbf16>, vector<8x32xf32> -> vector<8x32xf32>
    %66 = arith.addf %48, %65 : vector<8x32xf32>
    %67 = vector.extract_strided_slice %9 {offsets = [0, 24], sizes = [8, 8], strides = [1, 1]} : vector<8x32xbf16> to vector<8x8xbf16>
    %cst_30 = arith.constant dense<0.000000e+00> : vector<8x8xf32>
    %68 = tpu.matmul %67, %10, %cst_30 {dimension_numbers = #tpu.dot_dimension_numbers<[1], [1], [0], [0], [0, 0, 1, 0], [], []>} : vector<8x8xbf16>, vector<8x8xbf16>, vector<8x8xf32> -> vector<8x8xf32>
    %cst_31 = arith.constant dense<0xFF800000> : vector<8xf32>
    %69 = vector.multi_reduction <maximumf>, %68, %cst_31 [1] : vector<8x8xf32> to vector<8xf32>
    %70 = vector.shape_cast %69 : vector<8xf32> to vector<8x1xf32>
    %71 = vector.broadcast %70 : vector<8x1xf32> to vector<8x8xf32>
    %72 = arith.subf %68, %71 : vector<8x8xf32>
    %73 = math.exp %72 : vector<8x8xf32>
    %cst_32 = arith.constant dense<0.000000e+00> : vector<8xf32>
    %74 = vector.multi_reduction <add>, %73, %cst_32 [1] : vector<8x8xf32> to vector<8xf32>
    %75 = vector.shape_cast %74 : vector<8xf32> to vector<8x1xf32>
    %76 = tpu.reciprocal %75 {approx = true} : vector<8x1xf32> -> vector<8x1xf32>
    %77 = vector.broadcast %76 : vector<8x1xf32> to vector<8x8xf32>
    %78 = arith.mulf %73, %77 : vector<8x8xf32>
    %79 = arith.truncf %78 : vector<8x8xf32> to vector<8x8xbf16>
    %cst_33 = arith.constant dense<0.000000e+00> : vector<8x8xf32>
    %80 = tpu.matmul %79, %11, %cst_33 {dimension_numbers = #tpu.dot_dimension_numbers<[1], [0], [0], [1], [0, 0, 1, 1], [], []>} : vector<8x8xbf16>, vector<8x8xbf16>, vector<8x8xf32> -> vector<8x8xf32>
    %81 = arith.truncf %80 : vector<8x8xf32> to vector<8x8xbf16>
    %c24 = arith.constant 24 : index
    %c0_34 = arith.constant 0 : index
    %82 = vector.load %arg7[%c24, %c0_34] : memref<32x32xbf16, #tpu.memory_space<vmem>>, vector<8x32xbf16>
    %cst_35 = arith.constant dense<0.000000e+00> : vector<8x32xf32>
    %83 = tpu.matmul %81, %82, %cst_35 {dimension_numbers = #tpu.dot_dimension_numbers<[1], [0], [0], [1], [0, 0, 1, 1], [], []>} : vector<8x8xbf16>, vector<8x32xbf16>, vector<8x32xf32> -> vector<8x32xf32>
    %84 = arith.addf %66, %83 : vector<8x32xf32>
    %c0_36 = arith.constant 0 : index
    %c0_37 = arith.constant 0 : index
    %c0_38 = arith.constant 0 : index
    %85 = vector.load %arg8[%c0_36, %c0_37, %c0_38] : memref<1x8x32xf32, #tpu.memory_space<vmem>>, vector<1x8x32xf32>
    %86 = vector.shape_cast %85 : vector<1x8x32xf32> to vector<8x32xf32>
    %87 = vector.shape_cast %84 : vector<8x32xf32> to vector<1x8x32xf32>
    tpu.vector_store %arg8[%c0_36, %c0_37, %c0_38], %87 {strides = array<i32>} : memref<1x8x32xf32, #tpu.memory_space<vmem>>, vector<1x8x32xf32>,
    return
  }
  func.func @transform_0(%arg0: i32, %arg1: i32) -> (i32, i32, i32) {
    %c0_i32 = arith.constant 0 : i32
    %c0_i32_0 = arith.constant 0 : i32
    return %arg0, %arg1, %c0_i32 : i32, i32, i32
  }
  func.func @transform_1(%arg0: i32, %arg1: i32) -> (i32, i32, i32) {
    %c0_i32 = arith.constant 0 : i32
    %c0_i32_0 = arith.constant 0 : i32
    %c0_i32_1 = arith.constant 0 : i32
    return %arg0, %c0_i32, %c0_i32_0 : i32, i32, i32
  }
  func.func @transform_2(%arg0: i32, %arg1: i32) -> (i32, i32) {
    %c0_i32 = arith.constant 0 : i32
    %c0_i32_0 = arith.constant 0 : i32
    %c0_i32_1 = arith.constant 0 : i32
    return %c0_i32, %c0_i32_0 : i32, i32
  }
  func.func @transform_3(%arg0: i32, %arg1: i32) -> (i32, i32) {
    %c0_i32 = arith.constant 0 : i32
    %c0_i32_0 = arith.constant 0 : i32
    %c0_i32_1 = arith.constant 0 : i32
    return %c0_i32, %c0_i32_0 : i32, i32
  }
  func.func @transform_4(%arg0: i32, %arg1: i32) -> (i32, i32) {
    %c0_i32 = arith.constant 0 : i32
    %c0_i32_0 = arith.constant 0 : i32
    %c0_i32_1 = arith.constant 0 : i32
    return %c0_i32, %c0_i32_0 : i32, i32
  }
  func.func @transform_5(%arg0: i32, %arg1: i32) -> (i32, i32) {
    %c0_i32 = arith.constant 0 : i32
    %c0_i32_0 = arith.constant 0 : i32
    %c0_i32_1 = arith.constant 0 : i32
    return %c0_i32, %c0_i32_0 : i32, i32
  }
  func.func @transform_6(%arg0: i32, %arg1: i32) -> (i32, i32, i32) {
    %c0_i32 = arith.constant 0 : i32
    %c0_i32_0 = arith.constant 0 : i32
    return %arg0, %arg1, %c0_i32 : i32, i32, i32
  }
}

</mosaic_0001>

<llo_original>
// kernel: tpu_custom_call.1
$region0: #{tpu_custom_call.1}
  #allocation0 [shape = 'u32[]', space=smem, size = 0x4, offset = 0x4, fixed_abs, tag = 'smem constant byte address 0x4 - core index']
  #allocation1 [shape = 'u32[144,128]{1,0:T(1,128)}', space=vmem, size = 0x12000, scoped, tag = 'internal scratch']
  #allocation2 [shape = 'bf16[8,8]{1,0:T(8,128)(2,1)}', space=vmem, size = 0x800, scoped, tag = 'scratch operand']
  #allocation3 [shape = 'bf16[8,8]{1,0:T(8,128)(2,1)}', space=vmem, size = 0x800, scoped, tag = 'scratch operand']
  %s0 = inlined_call_operand.vmem [shape: bf16[2,8,32], index: 0, kind: input, shape index: {}]
  %s1 = inlined_call_operand.hbm [shape: bf16[2,8,32], index: 1, kind: input, shape index: {}]
  %s2 = inlined_call_operand.vmem [shape: bf16[32,32], index: 2, kind: input, shape index: {}]
  %s3 = inlined_call_operand.vmem [shape: bf16[32,8], index: 3, kind: input, shape index: {}]
  %s4 = inlined_call_operand.vmem [shape: bf16[32,8], index: 4, kind: input, shape index: {}]
  %s5 = inlined_call_operand.vmem [shape: bf16[32,32], index: 5, kind: input, shape index: {}]
  %s6 = inlined_call_operand.hbm [shape: f32[2,8,32], index: 6, kind: output, shape index: {}]
  %s7 = sld [smem:[#allocation0]]
  $region65: #{tpu_custom_call.1} parent=0
    _
  %s9 = ssub.s32 1, %s7
  %s10 = scalar_select 0, %s9, %s7
  $region1: #{tpu_custom_call.1} parent=0
    #allocation4 [shape = 'u8[4096]{0}', space=vmem, size = 0x1000, scoped, tag = 'input window, operand 1']
    #allocation5 [shape = 's32[2]{0}', space=sflag, size = 0x8, scoped, tag = 'scoped memory for tpu_custom_call.1']
    #allocation6 [shape = 's32[2]{0}', space=sflag, size = 0x8, scoped, tag = 'scoped memory for tpu_custom_call.1']
    #allocation7 [shape = 'u8[8192]{0}', space=vmem, size = 0x2000, scoped, tag = 'output window, operand 0']
    %11 = vsyncpa [#allocation5], 0
    %s12 = scalar_lea.sflag [#allocation5], 1
    %13 = vsyncpa %s12, 0
    %14 = vsyncpa [#allocation6], 0
    %s15 = scalar_lea.sflag [#allocation6], 1
    %16 = vsyncpa %s15, 0
    loop: start=0, step=1, limit=4
    $region2: #{tpu_custom_call.1} parent=1 // loop_pre_header
      _
    $region3: #{tpu_custom_call.1} parent=1 // loop_header
      %s18 = sphi 0, %s22
      %p19 = scmp.ge.s32.totalorder %s18, 4
      %s25 = sphi 0, %s37
      %s26 = sphi 0, %s33
      %s27 = sphi 0, %s25
      %s28 = sphi 0, %s26
      %s29 = sphi 0, %s27
      %s30 = sphi 0, %s28
      %s42 = sphi 0, %s44
      %s45 = sphi 0, %s42
      %s46 = sphi 0, %s45
      %s62 = sphi 0, %s46
      %s68 = sphi 0, %s70
      %s71 = sphi 0, %s68
      %s72 = sphi 0, %s71
      %s88 = sphi 0, %s72
      %s92 = sphi 0, %s92
      %s94 = sphi 0, %s92
      %s95 = sphi 0, %s94
      %s109 = sphi 0, %s95
      %s113 = sphi 0, %s113
      %s115 = sphi 0, %s113
      %s116 = sphi 0, %s115
      %s130 = sphi 0, %s116
      %s134 = sphi 0, %s134
      %s136 = sphi 0, %s134
      %s137 = sphi 0, %s136
      %s151 = sphi 0, %s137
      %s155 = sphi 0, %s155
      %s157 = sphi 0, %s155
      %s158 = sphi 0, %s157
      %s172 = sphi 0, %s158
      %s180 = sphi 0, %s182
      %s183 = sphi 0, %s180
      %s184 = sphi 0, %s183
      %s200 = sphi 0, %s184
    $region4: #{tpu_custom_call.1} parent=1 // loop_header_branch
      %21 = sbr.rel (%p19) target = $region8
    $region5: #{tpu_custom_call.1} parent=1 // loop_body
      %s23 = ssub.s32 %s18, 1
      %s24 = ssub.s32 %s18, 2
      %s31 = sadd.s32 1, %s26
      %p32 = scmp.ge.s32.totalorder %s31, 1
      %s33 = scalar_select %p32, 0, %s31
      %s34 = sadd.s32 1, %s25
      %s35 = scalar_select %p32, %s34, %s25
      %p36 = scmp.ge.s32.totalorder %s35, 2
      %s37 = scalar_select %p36, 0, %s35
      %s38 = ssub.s32 %s25, %s37
      %s39 = ssub.s32 %s26, %s33
      %s40 = sor.u32 %s38, %s39
      %p41 = scmp.eq.s32.totalorder %s40, 0
      %s43 = sadd.s32 %s42, 1
      %s44 = scalar_select %p41, %s42, %s43
      %p47 = pneg %p41
      %p48 = scmp.eq.s32.totalorder %s18, 1
      %p49 = por %p47, %p48
      %p50 = scmp.ne.s32.totalorder %s42, %s45
      %p51 = scmp.eq.s32.totalorder %s18, 0
      %p52 = por %p50, %p51
      %p53 = scmp.ne.s32.totalorder %s42, %s45
      %p54 = scmp.eq.s32.totalorder %s23, 1
      %p55 = por %p53, %p54
      %p56 = scmp.ne.s32.totalorder %s45, %s46
      %p57 = scmp.eq.s32.totalorder %s23, 0
      %p58 = por %p56, %p57
      %p59 = scmp.ne.s32.totalorder %s45, %s46
      %p60 = scmp.eq.s32.totalorder %s24, 1
      %p61 = por %p59, %p60
      %p63 = scmp.ne.s32.totalorder %s46, %s62
      %p64 = scmp.eq.s32.totalorder %s24, 0
      %p65 = por %p63, %p64
      %s66 = ssub.s32 %s25, %s37
      %p67 = scmp.eq.s32.totalorder %s66, 0
      %s69 = sadd.s32 %s68, 1
      %s70 = scalar_select %p67, %s68, %s69
      %p73 = pneg %p67
      %p74 = scmp.eq.s32.totalorder %s18, 1
      %p75 = por %p73, %p74
      %p76 = scmp.ne.s32.totalorder %s68, %s71
      %p77 = scmp.eq.s32.totalorder %s18, 0
      %p78 = por %p76, %p77
      %p79 = scmp.ne.s32.totalorder %s68, %s71
      %p80 = scmp.eq.s32.totalorder %s23, 1
      %p81 = por %p79, %p80
      %p82 = scmp.ne.s32.totalorder %s71, %s72
      %p83 = scmp.eq.s32.totalorder %s23, 0
      %p84 = por %p82, %p83
      %p85 = scmp.ne.s32.totalorder %s71, %s72
      %p86 = scmp.eq.s32.totalorder %s24, 1
      %p87 = por %p85, %p86
      %p89 = scmp.ne.s32.totalorder %s72, %s88
      %p90 = scmp.eq.s32.totalorder %s24, 0
      %p91 = por %p89, %p90
      %s93 = sadd.s32 %s92, 1
      %p96 = scmp.eq.s32.totalorder %s18, 1
      %p97 = scmp.ne.s32.totalorder %s92, %s94
      %p98 = scmp.eq.s32.totalorder %s18, 0
      %p99 = por %p97, %p98
      %p100 = scmp.ne.s32.totalorder %s92, %s94
      %p101 = scmp.eq.s32.totalorder %s23, 1
      %p102 = por %p100, %p101
      %p103 = scmp.ne.s32.totalorder %s94, %s95
      %p104 = scmp.eq.s32.totalorder %s23, 0
      %p105 = por %p103, %p104
      %p106 = scmp.ne.s32.totalorder %s94, %s95
      %p107 = scmp.eq.s32.totalorder %s24, 1
      %p108 = por %p106, %p107
      %p110 = scmp.ne.s32.totalorder %s95, %s109
      %p111 = scmp.eq.s32.totalorder %s24, 0
      %p112 = por %p110, %p111
      %s114 = sadd.s32 %s113, 1
      %p117 = scmp.eq.s32.totalorder %s18, 1
      %p118 = scmp.ne.s32.totalorder %s113, %s115
      %p119 = scmp.eq.s32.totalorder %s18, 0
      %p120 = por %p118, %p119
      %p121 = scmp.ne.s32.totalorder %s113, %s115
      %p122 = scmp.eq.s32.totalorder %s23, 1
      %p123 = por %p121, %p122
      %p124 = scmp.ne.s32.totalorder %s115, %s116
      %p125 = scmp.eq.s32.totalorder %s23, 0
      %p126 = por %p124, %p125
      %p127 = scmp.ne.s32.totalorder %s115, %s116
      %p128 = scmp.eq.s32.totalorder %s24, 1
      %p129 = por %p127, %p128
      %p131 = scmp.ne.s32.totalorder %s116, %s130
      %p132 = scmp.eq.s32.totalorder %s24, 0
      %p133 = por %p131, %p132
      %s135 = sadd.s32 %s134, 1
      %p138 = scmp.eq.s32.totalorder %s18, 1
      %p139 = scmp.ne.s32.totalorder %s134, %s136
      %p140 = scmp.eq.s32.totalorder %s18, 0
      %p141 = por %p139, %p140
      %p142 = scmp.ne.s32.totalorder %s134, %s136
      %p143 = scmp.eq.s32.totalorder %s23, 1
      %p144 = por %p142, %p143
      %p145 = scmp.ne.s32.totalorder %s136, %s137
      %p146 = scmp.eq.s32.totalorder %s23, 0
      %p147 = por %p145, %p146
      %p148 = scmp.ne.s32.totalorder %s136, %s137
      %p149 = scmp.eq.s32.totalorder %s24, 1
      %p150 = por %p148, %p149
      %p152 = scmp.ne.s32.totalorder %s137, %s151
      %p153 = scmp.eq.s32.totalorder %s24, 0
      %p154 = por %p152, %p153
      %s156 = sadd.s32 %s155, 1
      %p159 = scmp.eq.s32.totalorder %s18, 1
      %p160 = scmp.ne.s32.totalorder %s155, %s157
      %p161 = scmp.eq.s32.totalorder %s18, 0
      %p162 = por %p160, %p161
      %p163 = scmp.ne.s32.totalorder %s155, %s157
      %p164 = scmp.eq.s32.totalorder %s23, 1
      %p165 = por %p163, %p164
      %p166 = scmp.ne.s32.totalorder %s157, %s158
      %p167 = scmp.eq.s32.totalorder %s23, 0
      %p168 = por %p166, %p167
      %p169 = scmp.ne.s32.totalorder %s157, %s158
      %p170 = scmp.eq.s32.totalorder %s24, 1
      %p171 = por %p169, %p170
      %p173 = scmp.ne.s32.totalorder %s158, %s172
      %p174 = scmp.eq.s32.totalorder %s24, 0
      %p175 = por %p173, %p174
      %s176 = ssub.s32 %s25, %s37
      %s177 = ssub.s32 %s26, %s33
      %s178 = sor.u32 %s176, %s177
      %p179 = scmp.eq.s32.totalorder %s178, 0
      %s181 = sadd.s32 %s180, 1
      %s182 = scalar_select %p179, %s180, %s181
      %p185 = pneg %p179
      %p186 = scmp.eq.s32.totalorder %s18, 1
      %p187 = por %p185, %p186
      %p188 = scmp.ne.s32.totalorder %s180, %s183
      %p189 = scmp.eq.s32.totalorder %s18, 0
      %p190 = por %p188, %p189
      %p191 = scmp.ne.s32.totalorder %s180, %s183
      %p192 = scmp.eq.s32.totalorder %s23, 1
      %p193 = por %p191, %p192
      %p194 = scmp.ne.s32.totalorder %s183, %s184
      %p195 = scmp.eq.s32.totalorder %s23, 0
      %p196 = por %p194, %p195
      %p197 = scmp.ne.s32.totalorder %s183, %s184
      %p198 = scmp.eq.s32.totalorder %s24, 1
      %p199 = por %p197, %p198
      %p201 = scmp.ne.s32.totalorder %s184, %s200
      %p202 = scmp.eq.s32.totalorder %s24, 0
      %p203 = por %p201, %p202
      %p204 = scmp.le.s32.totalorder 1, %s18
      %p205 = scmp.lt.s32.totalorder %s18, 3
      %p206 = pnand %p204, %p205
      %p207 = pneg %p206
      // Predicated region
      $region9: #{tpu_custom_call.1} parent=5 // pred_check
        _
      $region10: #{tpu_custom_call.1} parent=5 // pred_check_branch
        %209 = sbr.rel (%p206) target = $region12
      $region11: #{tpu_custom_call.1} parent=5 // pred_region
        %s210 = ssub.s32 %s18, 1
        // Predicated region
        $region13: #{tpu_custom_call.1} parent=11 // pred_check
          %p211 = pneg %p105
        $region14: #{tpu_custom_call.1} parent=11 // pred_check_branch
          %213 = sbr.rel (%p211) target = $region16
        $region15: #{tpu_custom_call.1} parent=11 // pred_region
          _
        $region16: #{tpu_custom_call.1} parent=11 // pred_fallthru
          _
        // Predicated region
        $region17: #{tpu_custom_call.1} parent=11 // pred_check
          %p214 = pneg %p126
        $region18: #{tpu_custom_call.1} parent=11 // pred_check_branch
          %216 = sbr.rel (%p214) target = $region20
        $region19: #{tpu_custom_call.1} parent=11 // pred_region
          _
        $region20: #{tpu_custom_call.1} parent=11 // pred_fallthru
          _
        // Predicated region
        $region21: #{tpu_custom_call.1} parent=11 // pred_check
          %p217 = pneg %p147
        $region22: #{tpu_custom_call.1} parent=11 // pred_check_branch
          %219 = sbr.rel (%p217) target = $region24
        $region23: #{tpu_custom_call.1} parent=11 // pred_region
          _
        $region24: #{tpu_custom_call.1} parent=11 // pred_fallthru
          _
        // Predicated region
        $region25: #{tpu_custom_call.1} parent=11 // pred_check
          %p220 = pneg %p168
        $region26: #{tpu_custom_call.1} parent=11 // pred_check_branch
          %222 = sbr.rel (%p220) target = $region28
        $region27: #{tpu_custom_call.1} parent=11 // pred_region
          _
        $region28: #{tpu_custom_call.1} parent=11 // pred_fallthru
          _
      $region12: #{tpu_custom_call.1} parent=5 // pred_fallthru
        _
      %p223 = scmp.lt.s32.totalorder %s18, 2
      // Predicated region
      $region29: #{tpu_custom_call.1} parent=5 // pred_check
        %p224 = pneg %p223
      $region30: #{tpu_custom_call.1} parent=5 // pred_check_branch
        %226 = sbr.rel (%p224) target = $region32
      $region31: #{tpu_custom_call.1} parent=5 // pred_region
        // Predicated region
        $region33: #{tpu_custom_call.1} parent=31 // pred_check
          %p227 = pneg %p52
        $region34: #{tpu_custom_call.1} parent=31 // pred_check_branch
          %229 = sbr.rel (%p227) target = $region36
        $region35: #{tpu_custom_call.1} parent=31 // pred_region
          %p230 = scmp.lt.s32.totalorder %s25, 1
          %s231 = scalar_select %p230, %s25, 1
          %p232 = scmp.lt.s32.totalorder %s26, 0
          %s233 = scalar_select %p232, %s26, 0
          %s234 = sadd.s32 %s233, %s231
          %s235 = smul.addr %s234, 4
          %s236 = scalar_lea.vmem %s0, %s235
        $region36: #{tpu_custom_call.1} parent=31 // pred_fallthru
          _
        // Predicated region
        $region37: #{tpu_custom_call.1} parent=31 // pred_check
          %p237 = pneg %p78
        $region38: #{tpu_custom_call.1} parent=31 // pred_check_branch
          %239 = sbr.rel (%p237) target = $region40
        $region39: #{tpu_custom_call.1} parent=31 // pred_region
          %s240 = sand.u32 %s68, 1
          %s241 = scalar_lea.sflag [#allocation5], %s240
          %s242 = sand.u32 %s68, 1
          %s243 = smul.addr %s242, 4
          %s244 = scalar_lea.vmem [#allocation4], %s243
          %s246 = ssub.s32 64, 64
          %247 = vsyncadd %s241, %s246
          %s248 = smul.addr %s25, 64
          %s249 = scalar_lea.hbm %s1, %s248
          %s251 = sshll.u32 %s244, 4
          %s252 = int_to_ptr.vmem [resolvable:$true] %s251
          %254 = dma.hbm_to_vmem [thread:$0]  %s249, 64, %s252, %s241
        $region40: #{tpu_custom_call.1} parent=31 // pred_fallthru
          _
      $region32: #{tpu_custom_call.1} parent=5 // pred_fallthru
        _
      %p255 = scmp.le.s32.totalorder 1, %s18
      %p256 = scmp.lt.s32.totalorder %s18, 3
      %p257 = pnand %p255, %p256
      %p258 = pneg %p257
      // Predicated region
      $region41: #{tpu_custom_call.1} parent=5 // pred_check
        _
      $region42: #{tpu_custom_call.1} parent=5 // pred_check_branch
        %260 = sbr.rel (%p257) target = $region44
      $region43: #{tpu_custom_call.1} parent=5 // pred_region
        %s261 = ssub.s32 %s18, 1
        %s262 = sand.u32 %s71, 1
        %s263 = scalar_lea.sflag [#allocation5], %s262
        %s264 = sand.u32 %s71, 1
        %s265 = smul.addr %s264, 4
        %s266 = scalar_lea.vmem [#allocation4], %s265
        // Predicated region
        $region45: #{tpu_custom_call.1} parent=43 // pred_check
          %p267 = pneg %p84
        $region46: #{tpu_custom_call.1} parent=43 // pred_check_branch
          %269 = sbr.rel (%p267) target = $region48
        $region47: #{tpu_custom_call.1} parent=43 // pred_region
          %270 = dma.done %s263, 64
        $region48: #{tpu_custom_call.1} parent=43 // pred_fallthru
          _
        %p271 = scmp.lt.s32.totalorder %s27, 1
        %s272 = scalar_select %p271, %s27, 1
        %p273 = scmp.lt.s32.totalorder %s28, 0
        %s274 = scalar_select %p273, %s28, 0
        %s275 = sadd.s32 %s274, %s272
        %s276 = smul.addr %s275, 4
        %s277 = scalar_lea.vmem %s0, %s276
        %p278 = pneg %p58
        %p279 = pneg %p55
        %s280 = sand.u32 %s71, 1
        %s281 = scalar_lea.sflag [#allocation5], %s280
        %s282 = sand.u32 %s71, 1
        %s283 = smul.addr %s282, 4
        %s284 = scalar_lea.vmem [#allocation4], %s283
        %p285 = pneg %p84
        %p286 = pneg %p81
        %p287 = pneg %p105
        %p288 = pneg %p102
        %p289 = pneg %p126
        %p290 = pneg %p123
        %p291 = pneg %p147
        %p292 = pneg %p144
        %p293 = pneg %p168
        %p294 = pneg %p165
        %p295 = pneg %p196
        %p296 = pneg %p193
        %s297 = sand.u32 %s183, 1
        %s298 = scalar_lea.sflag [#allocation6], %s297
        %s299 = sand.u32 %s183, 1
        %s300 = smul.addr %s299, 8
        %s301 = scalar_lea.vmem [#allocation7], %s300
        %p302 = scmp.lt.s32.totalorder %s27, 1
        %s303 = scalar_select %p302, %s27, 1
        %p304 = scmp.lt.s32.totalorder %s28, 0
        %s305 = scalar_select %p304, %s28, 0
        %s306 = sadd.s32 %s305, %s303
        %s307 = smul.addr %s306, 4
        %s308 = scalar_lea.vmem %s0, %s307
        %p310 = scmp.eq.s32.totalorder %s28, 0
        // Predicated region
        $region49: #{tpu_custom_call.1} parent=43 // pred_check
          %p311 = pneg %p310
        $region50: #{tpu_custom_call.1} parent=43 // pred_check_branch
          %313 = sbr.rel (%p311) target = $region52
        $region51: #{tpu_custom_call.1} parent=43 // pred_region
          %v314 = vld [vmem:[%s266] sm:$0xf]
          %v315 = vld [vmem:[%s3] sm:$0xf]
          %v316 = vld [vmem:[%s3 + $0x4] sm:$0xf]
          %v317 = vld [vmem:[%s3 + $0x8] sm:$0xf]
          %v318 = vld [vmem:[%s3 + $0xc] sm:$0xf]
          %v323 = vunpack.c.l.b16 %v315
          %v324 = vunpack.c.l.b16 %v316
          %v325 = vunpack.c.l.b16 %v317
          %v326 = vunpack.c.l.b16 %v318
          %v327 = vpack.c.b16 %v324, %v323
          %v328 = vpack.c.b16 %v326, %v325
          %vm331 = vcmask 261120
          %v333 = vsel %vm331, %v314, 0
          %335 = vmatprep.subr.bf16.mxu0 0
          %336 = vmatpush1.bf16.msra.mxu0 %v327
          %337 = vmatprep.subr.bf16.mxu0 0
          %338 = vmatpush1.bf16.msra.mxu0 %v328
          %339 = vmatprep.subr.bf16.mxu0 0
          %340 = vmatpush1.bf16.msra.mxu0 0
          %341 = vmatprep.subr.bf16.mxu0 0
          %342 = vmatpush1.bf16.msra.mxu0 0
          %343 = vmatprep.subr.bf16.mxu0 0
          %344 = vmatpush1.bf16.msra.mxu0 0
          %345 = vmatprep.subr.bf16.mxu0 0
          %346 = vmatpush1.bf16.msra.mxu0 0
          %347 = vmatprep.subr.bf16.mxu0 0
          %348 = vmatpush1.bf16.msra.mxu0 0
          %349 = vmatprep.subr.bf16.mxu0 0
          %350 = vmatpush1.bf16.msra.mxu0 0
          %351 = vmatprep.subr.bf16.mxu0 0
          %352 = vmatpush1.bf16.msra.mxu0 0
          %353 = vmatprep.subr.bf16.mxu0 0
          %354 = vmatpush1.bf16.msra.mxu0 0
          %355 = vmatprep.subr.bf16.mxu0 0
          %356 = vmatpush1.bf16.msra.mxu0 0
          %357 = vmatprep.subr.bf16.mxu0 0
          %358 = vmatpush1.bf16.msra.mxu0 0
          %359 = vmatprep.subr.bf16.mxu0 0
          %360 = vmatpush1.bf16.msra.mxu0 0
          %361 = vmatprep.subr.bf16.mxu0 0
          %362 = vmatpush1.bf16.msra.mxu0 0
          %363 = vmatprep.subr.bf16.mxu0 0
          %364 = vmatpush1.bf16.msra.mxu0 0
          %365 = vmatprep.subr.bf16.mxu0 0
          %366 = vmatpush1.bf16.msra.mxu0 0
          %367 = vmatprep.mubr.bf16.mxu0 0
          %368 = vmatmul.mubr.bf16.gmra.mrb[0].mxu0 %v333
          %v369 = vpop.f32.mrb[0].mxu0
          %v370 = vadd.f32 0.0, %v369
          %v371 = vpop.f32.mrb[0].mxu0
          %v372 = vpop.f32.mrb[0].mxu0
          %v373 = vpop.f32.mrb[0].mxu0
          %374 = vdwg.mxu0
          %v375 = vpack.c.bf16 %v370, %v370
          %vm376 = vcmask 60416
          %377 = vst.msk [vmem:[#allocation2] sm:$0xf] %vm376, %v375
          %v378 = vld [vmem:[%s4] sm:$0xf]
          %v379 = vld [vmem:[%s4 + $0x4] sm:$0xf]
          %v380 = vld [vmem:[%s4 + $0x8] sm:$0xf]
          %v381 = vld [vmem:[%s4 + $0xc] sm:$0xf]
          %v386 = vunpack.c.l.b16 %v378
          %v387 = vunpack.c.l.b16 %v379
          %v388 = vunpack.c.l.b16 %v380
          %v389 = vunpack.c.l.b16 %v381
          %v390 = vpack.c.b16 %v387, %v386
          %v391 = vpack.c.b16 %v389, %v388
          %394 = vmatprep.subr.bf16.mxu0 0
          %395 = vmatpush1.bf16.msra.mxu0 %v390
          %396 = vmatprep.subr.bf16.mxu0 0
          %397 = vmatpush1.bf16.msra.mxu0 %v391
          %398 = vmatprep.subr.bf16.mxu0 0
          %399 = vmatpush1.bf16.msra.mxu0 0
          %400 = vmatprep.subr.bf16.mxu0 0
          %401 = vmatpush1.bf16.msra.mxu0 0
          %402 = vmatprep.subr.bf16.mxu0 0
          %403 = vmatpush1.bf16.msra.mxu0 0
          %404 = vmatprep.subr.bf16.mxu0 0
          %405 = vmatpush1.bf16.msra.mxu0 0
          %406 = vmatprep.subr.bf16.mxu0 0
          %407 = vmatpush1.bf16.msra.mxu0 0
          %408 = vmatprep.subr.bf16.mxu0 0
          %409 = vmatpush1.bf16.msra.mxu0 0
          %410 = vmatprep.subr.bf16.mxu0 0
          %411 = vmatpush1.bf16.msra.mxu0 0
          %412 = vmatprep.subr.bf16.mxu0 0
          %413 = vmatpush1.bf16.msra.mxu0 0
          %414 = vmatprep.subr.bf16.mxu0 0
          %415 = vmatpush1.bf16.msra.mxu0 0
          %416 = vmatprep.subr.bf16.mxu0 0
          %417 = vmatpush1.bf16.msra.mxu0 0
          %418 = vmatprep.subr.bf16.mxu0 0
          %419 = vmatpush1.bf16.msra.mxu0 0
          %420 = vmatprep.subr.bf16.mxu0 0
          %421 = vmatpush1.bf16.msra.mxu0 0
          %422 = vmatprep.subr.bf16.mxu0 0
          %423 = vmatpush1.bf16.msra.mxu0 0
          %424 = vmatprep.subr.bf16.mxu0 0
          %425 = vmatpush1.bf16.msra.mxu0 0
          %426 = vmatprep.mubr.bf16.mxu0 0
          %427 = vmatmul.mubr.bf16.gmra.mrb[0].mxu0 %v333
          %v428 = vpop.f32.mrb[0].mxu0
          %v429 = vadd.f32 0.0, %v428
          %v430 = vpop.f32.mrb[0].mxu0
          %v431 = vpop.f32.mrb[0].mxu0
          %v432 = vpop.f32.mrb[0].mxu0
          %433 = vdwg.mxu0
          %v434 = vpack.c.bf16 %v429, %v429
          %435 = vst.msk [vmem:[#allocation3] sm:$0xf] %vm376, %v434
        $region52: #{tpu_custom_call.1} parent=43 // pred_fallthru
          _
        %v436 = vld [vmem:[%s308] sm:$0xf]
        %v437 = vld [vmem:[%s2] sm:$0xf]
        %v438 = vld [vmem:[%s2 + $0x4] sm:$0xf]
        %v439 = vld [vmem:[%s2 + $0x8] sm:$0xf]
        %v440 = vld [vmem:[%s2 + $0xc] sm:$0xf]
        %v445 = vunpack.c.l.b16 %v437
        %v446 = vunpack.c.l.b16 %v438
        %v447 = vunpack.c.l.b16 %v439
        %v448 = vunpack.c.l.b16 %v440
        %v449 = vpack.c.b16 %v446, %v445
        %v450 = vpack.c.b16 %v448, %v447
        %vm453 = vcmask 261120
        %v455 = vsel %vm453, %v436, 0
        %457 = vmatprep.subr.bf16.mxu0 0
        %458 = vmatpush1.bf16.msra.mxu0 %v449
        %459 = vmatprep.subr.bf16.mxu0 0
        %460 = vmatpush1.bf16.msra.mxu0 %v450
        %461 = vmatprep.subr.bf16.mxu0 0
        %462 = vmatpush1.bf16.msra.mxu0 0
        %463 = vmatprep.subr.bf16.mxu0 0
        %464 = vmatpush1.bf16.msra.mxu0 0
        %465 = vmatprep.subr.bf16.mxu0 0
        %466 = vmatpush1.bf16.msra.mxu0 0
        %467 = vmatprep.subr.bf16.mxu0 0
        %468 = vmatpush1.bf16.msra.mxu0 0
        %469 = vmatprep.subr.bf16.mxu0 0
        %470 = vmatpush1.bf16.msra.mxu0 0
        %471 = vmatprep.subr.bf16.mxu0 0
        %472 = vmatpush1.bf16.msra.mxu0 0
        %473 = vmatprep.subr.bf16.mxu0 0
        %474 = vmatpush1.bf16.msra.mxu0 0
        %475 = vmatprep.subr.bf16.mxu0 0
        %476 = vmatpush1.bf16.msra.mxu0 0
        %477 = vmatprep.subr.bf16.mxu0 0
        %478 = vmatpush1.bf16.msra.mxu0 0
        %479 = vmatprep.subr.bf16.mxu0 0
        %480 = vmatpush1.bf16.msra.mxu0 0
        %481 = vmatprep.subr.bf16.mxu0 0
        %482 = vmatpush1.bf16.msra.mxu0 0
        %483 = vmatprep.subr.bf16.mxu0 0
        %484 = vmatpush1.bf16.msra.mxu0 0
        %485 = vmatprep.subr.bf16.mxu0 0
        %486 = vmatpush1.bf16.msra.mxu0 0
        %487 = vmatprep.subr.bf16.mxu0 0
        %488 = vmatpush1.bf16.msra.mxu0 0
        %489 = vmatprep.mubr.bf16.mxu0 0
        %490 = vmatmul.mubr.bf16.gmra.mrb[0].mxu0 %v455
        %v491 = vpop.f32.mrb[0].mxu0
        %v492 = vadd.f32 0.0, %v491
        %v493 = vpop.f32.mrb[0].mxu0
        %v494 = vpop.f32.mrb[0].mxu0
        %v495 = vpop.f32.mrb[0].mxu0
        %496 = vdwg.mxu0
        %v497 = vmul.f32 %v492, 0.35355338
        %v498 = vpack.c.bf16 %v497, %v497
        %v499 = vld [vmem:[#allocation2] sm:$0xf]
        %v500 = vld [vmem:[#allocation3] sm:$0xf]
        %vm501 = vcmask 64512
        %v503 = vsel %vm501, %v498, 0
        %v506 = vsel %vm501, %v499, 0
        %508 = vmatprep.subr.bf16.mxu0 0
        %509 = vmatpush1.bf16.xpose.msra.mxu0 %v506
        %510 = vmatprep.subr.bf16.mxu0 0
        %511 = vmatpush1.bf16.xpose.msra.mxu0 0
        %512 = vmatprep.subr.bf16.mxu0 0
        %513 = vmatpush1.bf16.xpose.msra.mxu0 0
        %514 = vmatprep.subr.bf16.mxu0 0
        %515 = vmatpush1.bf16.xpose.msra.mxu0 0
        %516 = vmatprep.subr.bf16.mxu0 0
        %517 = vmatpush1.bf16.xpose.msra.mxu0 0
        %518 = vmatprep.subr.bf16.mxu0 0
        %519 = vmatpush1.bf16.xpose.msra.mxu0 0
        %520 = vmatprep.subr.bf16.mxu0 0
        %521 = vmatpush1.bf16.xpose.msra.mxu0 0
        %522 = vmatprep.subr.bf16.mxu0 0
        %523 = vmatpush1.bf16.xpose.msra.mxu0 0
        %524 = vmatprep.subr.bf16.mxu0 0
        %525 = vmatpush1.bf16.xpose.msra.mxu0 0
        %526 = vmatprep.subr.bf16.mxu0 0
        %527 = vmatpush1.bf16.xpose.msra.mxu0 0
        %528 = vmatprep.subr.bf16.mxu0 0
        %529 = vmatpush1.bf16.xpose.msra.mxu0 0
        %530 = vmatprep.subr.bf16.mxu0 0
        %531 = vmatpush1.bf16.xpose.msra.mxu0 0
        %532 = vmatprep.subr.bf16.mxu0 0
        %533 = vmatpush1.bf16.xpose.msra.mxu0 0
        %534 = vmatprep.subr.bf16.mxu0 0
        %535 = vmatpush1.bf16.xpose.msra.mxu0 0
        %536 = vmatprep.subr.bf16.mxu0 0
        %537 = vmatpush1.bf16.xpose.msra.mxu0 0
        %538 = vmatprep.subr.bf16.mxu0 0
        %539 = vmatpush1.bf16.xpose.msra.mxu0 0
        %540 = vmatprep.mubr.bf16.mxu0 0
        %541 = vmatmul.mubr.bf16.gmra.mrb[0].mxu0 %v503
        %v542 = vpop.f32.mrb[0].mxu0
        %v543 = vadd.f32 0.0, %v542
        %v544 = vpop.f32.mrb[0].mxu0
        %v545 = vpop.f32.mrb[0].mxu0
        %v546 = vpop.f32.mrb[0].mxu0
        %547 = vdwg.mxu0
        %v548 = vsel %vm501, %v543, -inf
        %549 = vmax.xlane.f32.xlu0 %v548
        %v550 = vpop.xlane.xlu0 %549
        %v551 = vsub.f32 %v543, %v550
        %v552 = vmul.f32 %v551, 1.442695
        %v553 = vpow.pop %v552
        %v554 = vsel %vm501, %v553, 0.0
        %555 = vadd.xlane.f32.xlu0 %v554
        %v556 = vpop.xlane.xlu0 %555
        %v557 = vrcp.pop %v556
        %v558 = vmul.f32 %v553, %v557
        %v559 = vpack.c.bf16 %v558, %v558
        %v561 = vsel %vm501, %v559, 0
        %vm563 = vcmask 1043456
        %v565 = vsel %vm563, %v500, 0
        %567 = vmatprep.subr.bf16.mxu0 0
        %568 = vmatpush1.bf16.msra.mxu0 %v565
        %569 = vmatprep.subr.bf16.mxu0 0
        %570 = vmatpush1.bf16.msra.mxu0 0
        %571 = vmatprep.subr.bf16.mxu0 0
        %572 = vmatpush1.bf16.msra.mxu0 0
        %573 = vmatprep.subr.bf16.mxu0 0
        %574 = vmatpush1.bf16.msra.mxu0 0
        %575 = vmatprep.subr.bf16.mxu0 0
        %576 = vmatpush1.bf16.msra.mxu0 0
        %577 = vmatprep.subr.bf16.mxu0 0
        %578 = vmatpush1.bf16.msra.mxu0 0
        %579 = vmatprep.subr.bf16.mxu0 0
        %580 = vmatpush1.bf16.msra.mxu0 0
        %581 = vmatprep.subr.bf16.mxu0 0
        %582 = vmatpush1.bf16.msra.mxu0 0
        %583 = vmatprep.subr.bf16.mxu0 0
        %584 = vmatpush1.bf16.msra.mxu0 0
        %585 = vmatprep.subr.bf16.mxu0 0
        %586 = vmatpush1.bf16.msra.mxu0 0
        %587 = vmatprep.subr.bf16.mxu0 0
        %588 = vmatpush1.bf16.msra.mxu0 0
        %589 = vmatprep.subr.bf16.mxu0 0
        %590 = vmatpush1.bf16.msra.mxu0 0
        %591 = vmatprep.subr.bf16.mxu0 0
        %592 = vmatpush1.bf16.msra.mxu0 0
        %593 = vmatprep.subr.bf16.mxu0 0
        %594 = vmatpush1.bf16.msra.mxu0 0
        %595 = vmatprep.subr.bf16.mxu0 0
        %596 = vmatpush1.bf16.msra.mxu0 0
        %597 = vmatprep.subr.bf16.mxu0 0
        %598 = vmatpush1.bf16.msra.mxu0 0
        %599 = vmatprep.mubr.bf16.mxu0 0
        %600 = vmatmul.mubr.bf16.gmra.mrb[0].mxu0 %v561
        %v601 = vpop.f32.mrb[0].mxu0
        %v602 = vadd.f32 0.0, %v601
        %v603 = vpop.f32.mrb[0].mxu0
        %v604 = vpop.f32.mrb[0].mxu0
        %v605 = vpop.f32.mrb[0].mxu0
        %606 = vdwg.mxu0
        %v607 = vpack.c.bf16 %v602, %v602
        %v608 = vld [vmem:[%s5] sm:$0xf]
        %610 = vrot.lane.b32.xlu0 %v498, 120
        %v611 = vpop.permute.xlu0 %610
        %v613 = vsel %vm501, %v611, 0
        %615 = vmatprep.subr.bf16.mxu0 0
        %616 = vmatpush1.bf16.xpose.msra.mxu0 %v506
        %617 = vmatprep.subr.bf16.mxu0 0
        %618 = vmatpush1.bf16.xpose.msra.mxu0 0
        %619 = vmatprep.subr.bf16.mxu0 0
        %620 = vmatpush1.bf16.xpose.msra.mxu0 0
        %621 = vmatprep.subr.bf16.mxu0 0
        %622 = vmatpush1.bf16.xpose.msra.mxu0 0
        %623 = vmatprep.subr.bf16.mxu0 0
        %624 = vmatpush1.bf16.xpose.msra.mxu0 0
        %625 = vmatprep.subr.bf16.mxu0 0
        %626 = vmatpush1.bf16.xpose.msra.mxu0 0
        %627 = vmatprep.subr.bf16.mxu0 0
        %628 = vmatpush1.bf16.xpose.msra.mxu0 0
        %629 = vmatprep.subr.bf16.mxu0 0
        %630 = vmatpush1.bf16.xpose.msra.mxu0 0
        %631 = vmatprep.subr.bf16.mxu0 0
        %632 = vmatpush1.bf16.xpose.msra.mxu0 0
        %633 = vmatprep.subr.bf16.mxu0 0
        %634 = vmatpush1.bf16.xpose.msra.mxu0 0
        %635 = vmatprep.subr.bf16.mxu0 0
        %636 = vmatpush1.bf16.xpose.msra.mxu0 0
        %637 = vmatprep.subr.bf16.mxu0 0
        %638 = vmatpush1.bf16.xpose.msra.mxu0 0
        %639 = vmatprep.subr.bf16.mxu0 0
        %640 = vmatpush1.bf16.xpose.msra.mxu0 0
        %641 = vmatprep.subr.bf16.mxu0 0
        %642 = vmatpush1.bf16.xpose.msra.mxu0 0
        %643 = vmatprep.subr.bf16.mxu0 0
        %644 = vmatpush1.bf16.xpose.msra.mxu0 0
        %645 = vmatprep.subr.bf16.mxu0 0
        %646 = vmatpush1.bf16.xpose.msra.mxu0 0
        %647 = vmatprep.mubr.bf16.mxu0 0
        %648 = vmatmul.mubr.bf16.gmra.mrb[0].mxu0 %v613
        %v649 = vpop.f32.mrb[0].mxu0
        %v650 = vadd.f32 0.0, %v649
        %v651 = vpop.f32.mrb[0].mxu0
        %v652 = vpop.f32.mrb[0].mxu0
        %v653 = vpop.f32.mrb[0].mxu0
        %654 = vdwg.mxu0
        %v655 = vsel %vm501, %v650, -inf
        %656 = vmax.xlane.f32.xlu0 %v655
        %v657 = vpop.xlane.xlu0 %656
        %v658 = vsub.f32 %v650, %v657
        %v659 = vmul.f32 %v658, 1.442695
        %v660 = vpow.pop %v659
        %v661 = vsel %vm501, %v660, 0.0
        %662 = vadd.xlane.f32.xlu0 %v661
        %v663 = vpop.xlane.xlu0 %662
        %v664 = vrcp.pop %v663
        %v665 = vmul.f32 %v660, %v664
        %v666 = vpack.c.bf16 %v665, %v665
        %v668 = vsel %vm501, %v666, 0
        %670 = vmatprep.subr.bf16.mxu0 0
        %671 = vmatpush1.bf16.msra.mxu0 %v565
        %672 = vmatprep.subr.bf16.mxu0 0
        %673 = vmatpush1.bf16.msra.mxu0 0
        %674 = vmatprep.subr.bf16.mxu0 0
        %675 = vmatpush1.bf16.msra.mxu0 0
        %676 = vmatprep.subr.bf16.mxu0 0
        %677 = vmatpush1.bf16.msra.mxu0 0
        %678 = vmatprep.subr.bf16.mxu0 0
        %679 = vmatpush1.bf16.msra.mxu0 0
        %680 = vmatprep.subr.bf16.mxu0 0
        %681 = vmatpush1.bf16.msra.mxu0 0
        %682 = vmatprep.subr.bf16.mxu0 0
        %683 = vmatpush1.bf16.msra.mxu0 0
        %684 = vmatprep.subr.bf16.mxu0 0
        %685 = vmatpush1.bf16.msra.mxu0 0
        %686 = vmatprep.subr.bf16.mxu0 0
        %687 = vmatpush1.bf16.msra.mxu0 0
        %688 = vmatprep.subr.bf16.mxu0 0
        %689 = vmatpush1.bf16.msra.mxu0 0
        %690 = vmatprep.subr.bf16.mxu0 0
        %691 = vmatpush1.bf16.msra.mxu0 0
        %692 = vmatprep.subr.bf16.mxu0 0
        %693 = vmatpush1.bf16.msra.mxu0 0
        %694 = vmatprep.subr.bf16.mxu0 0
        %695 = vmatpush1.bf16.msra.mxu0 0
        %696 = vmatprep.subr.bf16.mxu0 0
        %697 = vmatpush1.bf16.msra.mxu0 0
        %698 = vmatprep.subr.bf16.mxu0 0
        %699 = vmatpush1.bf16.msra.mxu0 0
        %700 = vmatprep.subr.bf16.mxu0 0
        %701 = vmatpush1.bf16.msra.mxu0 0
        %702 = vmatprep.mubr.bf16.mxu0 0
        %703 = vmatmul.mubr.bf16.gmra.mrb[0].mxu0 %v668
        %v704 = vpop.f32.mrb[0].mxu0
        %v705 = vadd.f32 0.0, %v704
        %v706 = vpop.f32.mrb[0].mxu0
        %v707 = vpop.f32.mrb[0].mxu0
        %v708 = vpop.f32.mrb[0].mxu0
        %709 = vdwg.mxu0
        %v710 = vpack.c.bf16 %v705, %v705
        %v711 = vld [vmem:[%s5 + $0x4] sm:$0xf]
        %v713 = vsel %vm501, %v710, 0
        %v716 = vsel %vm563, %v711, 0
        %718 = vmatprep.subr.bf16.mxu0 0
        %719 = vmatpush1.bf16.msra.mxu0 %v716
        %720 = vmatprep.subr.bf16.mxu0 0
        %721 = vmatpush1.bf16.msra.mxu0 0
        %722 = vmatprep.subr.bf16.mxu0 0
        %723 = vmatpush1.bf16.msra.mxu0 0
        %724 = vmatprep.subr.bf16.mxu0 0
        %725 = vmatpush1.bf16.msra.mxu0 0
        %726 = vmatprep.subr.bf16.mxu0 0
        %727 = vmatpush1.bf16.msra.mxu0 0
        %728 = vmatprep.subr.bf16.mxu0 0
        %729 = vmatpush1.bf16.msra.mxu0 0
        %730 = vmatprep.subr.bf16.mxu0 0
        %731 = vmatpush1.bf16.msra.mxu0 0
        %732 = vmatprep.subr.bf16.mxu0 0
        %733 = vmatpush1.bf16.msra.mxu0 0
        %734 = vmatprep.subr.bf16.mxu0 0
        %735 = vmatpush1.bf16.msra.mxu0 0
        %736 = vmatprep.subr.bf16.mxu0 0
        %737 = vmatpush1.bf16.msra.mxu0 0
        %738 = vmatprep.subr.bf16.mxu0 0
        %739 = vmatpush1.bf16.msra.mxu0 0
        %740 = vmatprep.subr.bf16.mxu0 0
        %741 = vmatpush1.bf16.msra.mxu0 0
        %742 = vmatprep.subr.bf16.mxu0 0
        %743 = vmatpush1.bf16.msra.mxu0 0
        %744 = vmatprep.subr.bf16.mxu0 0
        %745 = vmatpush1.bf16.msra.mxu0 0
        %746 = vmatprep.subr.bf16.mxu0 0
        %747 = vmatpush1.bf16.msra.mxu0 0
        %748 = vmatprep.subr.bf16.mxu0 0
        %749 = vmatpush1.bf16.msra.mxu0 0
        %750 = vmatprep.mubr.bf16.mxu0 0
        %751 = vmatmul.mubr.bf16.gmra.mrb[0].mxu0 %v713
        %v752 = vpop.f32.mrb[0].mxu0
        %v753 = vadd.f32 0.0, %v752
        %v754 = vpop.f32.mrb[0].mxu0
        %v755 = vpop.f32.mrb[0].mxu0
        %v756 = vpop.f32.mrb[0].mxu0
        %757 = vdwg.mxu0
        %v759 = vsel %vm501, %v607, 0
        %v762 = vsel %vm563, %v608, 0
        %764 = vmatprep.subr.bf16.mxu0 0
        %765 = vmatpush1.bf16.msra.mxu0 %v762
        %766 = vmatprep.subr.bf16.mxu0 0
        %767 = vmatpush1.bf16.msra.mxu0 0
        %768 = vmatprep.subr.bf16.mxu0 0
        %769 = vmatpush1.bf16.msra.mxu0 0
        %770 = vmatprep.subr.bf16.mxu0 0
        %771 = vmatpush1.bf16.msra.mxu0 0
        %772 = vmatprep.subr.bf16.mxu0 0
        %773 = vmatpush1.bf16.msra.mxu0 0
        %774 = vmatprep.subr.bf16.mxu0 0
        %775 = vmatpush1.bf16.msra.mxu0 0
        %776 = vmatprep.subr.bf16.mxu0 0
        %777 = vmatpush1.bf16.msra.mxu0 0
        %778 = vmatprep.subr.bf16.mxu0 0
        %779 = vmatpush1.bf16.msra.mxu0 0
        %780 = vmatprep.subr.bf16.mxu0 0
        %781 = vmatpush1.bf16.msra.mxu0 0
        %782 = vmatprep.subr.bf16.mxu0 0
        %783 = vmatpush1.bf16.msra.mxu0 0
        %784 = vmatprep.subr.bf16.mxu0 0
        %785 = vmatpush1.bf16.msra.mxu0 0
        %786 = vmatprep.subr.bf16.mxu0 0
        %787 = vmatpush1.bf16.msra.mxu0 0
        %788 = vmatprep.subr.bf16.mxu0 0
        %789 = vmatpush1.bf16.msra.mxu0 0
        %790 = vmatprep.subr.bf16.mxu0 0
        %791 = vmatpush1.bf16.msra.mxu0 0
        %792 = vmatprep.subr.bf16.mxu0 0
        %793 = vmatpush1.bf16.msra.mxu0 0
        %794 = vmatprep.subr.bf16.mxu0 0
        %795 = vmatpush1.bf16.msra.mxu0 0
        %796 = vmatprep.mubr.bf16.mxu0 0
        %797 = vmatmul.mubr.bf16.gmra.mrb[0].mxu0 %v759
        %v798 = vpop.f32.mrb[0].mxu0
        %v799 = vadd.f32 %v753, %v798
        %v800 = vpop.f32.mrb[0].mxu0
        %v801 = vpop.f32.mrb[0].mxu0
        %v802 = vpop.f32.mrb[0].mxu0
        %803 = vdwg.mxu0
        %804 = vrot.lane.b32.xlu0 %v498, 112
        %v805 = vpop.permute.xlu0 %804
        %v807 = vsel %vm501, %v805, 0
        %809 = vmatprep.subr.bf16.mxu0 0
        %810 = vmatpush1.bf16.xpose.msra.mxu0 %v506
        %811 = vmatprep.subr.bf16.mxu0 0
        %812 = vmatpush1.bf16.xpose.msra.mxu0 0
        %813 = vmatprep.subr.bf16.mxu0 0
        %814 = vmatpush1.bf16.xpose.msra.mxu0 0
        %815 = vmatprep.subr.bf16.mxu0 0
        %816 = vmatpush1.bf16.xpose.msra.mxu0 0
        %817 = vmatprep.subr.bf16.mxu0 0
        %818 = vmatpush1.bf16.xpose.msra.mxu0 0
        %819 = vmatprep.subr.bf16.mxu0 0
        %820 = vmatpush1.bf16.xpose.msra.mxu0 0
        %821 = vmatprep.subr.bf16.mxu0 0
        %822 = vmatpush1.bf16.xpose.msra.mxu0 0
        %823 = vmatprep.subr.bf16.mxu0 0
        %824 = vmatpush1.bf16.xpose.msra.mxu0 0
        %825 = vmatprep.subr.bf16.mxu0 0
        %826 = vmatpush1.bf16.xpose.msra.mxu0 0
        %827 = vmatprep.subr.bf16.mxu0 0
        %828 = vmatpush1.bf16.xpose.msra.mxu0 0
        %829 = vmatprep.subr.bf16.mxu0 0
        %830 = vmatpush1.bf16.xpose.msra.mxu0 0
        %831 = vmatprep.subr.bf16.mxu0 0
        %832 = vmatpush1.bf16.xpose.msra.mxu0 0
        %833 = vmatprep.subr.bf16.mxu0 0
        %834 = vmatpush1.bf16.xpose.msra.mxu0 0
        %835 = vmatprep.subr.bf16.mxu0 0
        %836 = vmatpush1.bf16.xpose.msra.mxu0 0
        %837 = vmatprep.subr.bf16.mxu0 0
        %838 = vmatpush1.bf16.xpose.msra.mxu0 0
        %839 = vmatprep.subr.bf16.mxu0 0
        %840 = vmatpush1.bf16.xpose.msra.mxu0 0
        %841 = vmatprep.mubr.bf16.mxu0 0
        %842 = vmatmul.mubr.bf16.gmra.mrb[0].mxu0 %v807
        %v843 = vpop.f32.mrb[0].mxu0
        %v844 = vadd.f32 0.0, %v843
        %v845 = vpop.f32.mrb[0].mxu0
        %v846 = vpop.f32.mrb[0].mxu0
        %v847 = vpop.f32.mrb[0].mxu0
        %848 = vdwg.mxu0
        %v849 = vsel %vm501, %v844, -inf
        %850 = vmax.xlane.f32.xlu0 %v849
        %v851 = vpop.xlane.xlu0 %850
        %v852 = vsub.f32 %v844, %v851
        %v853 = vmul.f32 %v852, 1.442695
        %v854 = vpow.pop %v853
        %v855 = vsel %vm501, %v854, 0.0
        %856 = vadd.xlane.f32.xlu0 %v855
        %v857 = vpop.xlane.xlu0 %856
        %v858 = vrcp.pop %v857
        %v859 = vmul.f32 %v854, %v858
        %v860 = vpack.c.bf16 %v859, %v859
        %v862 = vsel %vm501, %v860, 0
        %864 = vmatprep.subr.bf16.mxu0 0
        %865 = vmatpush1.bf16.msra.mxu0 %v565
        %866 = vmatprep.subr.bf16.mxu0 0
        %867 = vmatpush1.bf16.msra.mxu0 0
        %868 = vmatprep.subr.bf16.mxu0 0
        %869 = vmatpush1.bf16.msra.mxu0 0
        %870 = vmatprep.subr.bf16.mxu0 0
        %871 = vmatpush1.bf16.msra.mxu0 0
        %872 = vmatprep.subr.bf16.mxu0 0
        %873 = vmatpush1.bf16.msra.mxu0 0
        %874 = vmatprep.subr.bf16.mxu0 0
        %875 = vmatpush1.bf16.msra.mxu0 0
        %876 = vmatprep.subr.bf16.mxu0 0
        %877 = vmatpush1.bf16.msra.mxu0 0
        %878 = vmatprep.subr.bf16.mxu0 0
        %879 = vmatpush1.bf16.msra.mxu0 0
        %880 = vmatprep.subr.bf16.mxu0 0
        %881 = vmatpush1.bf16.msra.mxu0 0
        %882 = vmatprep.subr.bf16.mxu0 0
        %883 = vmatpush1.bf16.msra.mxu0 0
        %884 = vmatprep.subr.bf16.mxu0 0
        %885 = vmatpush1.bf16.msra.mxu0 0
        %886 = vmatprep.subr.bf16.mxu0 0
        %887 = vmatpush1.bf16.msra.mxu0 0
        %888 = vmatprep.subr.bf16.mxu0 0
        %889 = vmatpush1.bf16.msra.mxu0 0
        %890 = vmatprep.subr.bf16.mxu0 0
        %891 = vmatpush1.bf16.msra.mxu0 0
        %892 = vmatprep.subr.bf16.mxu0 0
        %893 = vmatpush1.bf16.msra.mxu0 0
        %894 = vmatprep.subr.bf16.mxu0 0
        %895 = vmatpush1.bf16.msra.mxu0 0
        %896 = vmatprep.mubr.bf16.mxu0 0
        %897 = vmatmul.mubr.bf16.gmra.mrb[0].mxu0 %v862
        %v898 = vpop.f32.mrb[0].mxu0
        %v899 = vadd.f32 0.0, %v898
        %v900 = vpop.f32.mrb[0].mxu0
        %v901 = vpop.f32.mrb[0].mxu0
        %v902 = vpop.f32.mrb[0].mxu0
        %903 = vdwg.mxu0
        %v904 = vpack.c.bf16 %v899, %v899
        %v905 = vld [vmem:[%s5 + $0x8] sm:$0xf]
        %v907 = vsel %vm501, %v904, 0
        %v910 = vsel %vm563, %v905, 0
        %912 = vmatprep.subr.bf16.mxu0 0
        %913 = vmatpush1.bf16.msra.mxu0 %v910
        %914 = vmatprep.subr.bf16.mxu0 0
        %915 = vmatpush1.bf16.msra.mxu0 0
        %916 = vmatprep.subr.bf16.mxu0 0
        %917 = vmatpush1.bf16.msra.mxu0 0
        %918 = vmatprep.subr.bf16.mxu0 0
        %919 = vmatpush1.bf16.msra.mxu0 0
        %920 = vmatprep.subr.bf16.mxu0 0
        %921 = vmatpush1.bf16.msra.mxu0 0
        %922 = vmatprep.subr.bf16.mxu0 0
        %923 = vmatpush1.bf16.msra.mxu0 0
        %924 = vmatprep.subr.bf16.mxu0 0
        %925 = vmatpush1.bf16.msra.mxu0 0
        %926 = vmatprep.subr.bf16.mxu0 0
        %927 = vmatpush1.bf16.msra.mxu0 0
        %928 = vmatprep.subr.bf16.mxu0 0
        %929 = vmatpush1.bf16.msra.mxu0 0
        %930 = vmatprep.subr.bf16.mxu0 0
        %931 = vmatpush1.bf16.msra.mxu0 0
        %932 = vmatprep.subr.bf16.mxu0 0
        %933 = vmatpush1.bf16.msra.mxu0 0
        %934 = vmatprep.subr.bf16.mxu0 0
        %935 = vmatpush1.bf16.msra.mxu0 0
        %936 = vmatprep.subr.bf16.mxu0 0
        %937 = vmatpush1.bf16.msra.mxu0 0
        %938 = vmatprep.subr.bf16.mxu0 0
        %939 = vmatpush1.bf16.msra.mxu0 0
        %940 = vmatprep.subr.bf16.mxu0 0
        %941 = vmatpush1.bf16.msra.mxu0 0
        %942 = vmatprep.subr.bf16.mxu0 0
        %943 = vmatpush1.bf16.msra.mxu0 0
        %944 = vmatprep.mubr.bf16.mxu0 0
        %945 = vmatmul.mubr.bf16.gmra.mrb[0].mxu0 %v907
        %v946 = vpop.f32.mrb[0].mxu0
        %v947 = vadd.f32 0.0, %v946
        %v948 = vpop.f32.mrb[0].mxu0
        %v949 = vpop.f32.mrb[0].mxu0
        %v950 = vpop.f32.mrb[0].mxu0
        %951 = vdwg.mxu0
        %v952 = vadd.f32 %v799, %v947
        %953 = vrot.lane.b32.xlu0 %v498, 104
        %v954 = vpop.permute.xlu0 %953
        %v956 = vsel %vm501, %v954, 0
        %958 = vmatprep.subr.bf16.mxu0 0
        %959 = vmatpush1.bf16.xpose.msra.mxu0 %v506
        %960 = vmatprep.subr.bf16.mxu0 0
        %961 = vmatpush1.bf16.xpose.msra.mxu0 0
        %962 = vmatprep.subr.bf16.mxu0 0
        %963 = vmatpush1.bf16.xpose.msra.mxu0 0
        %964 = vmatprep.subr.bf16.mxu0 0
        %965 = vmatpush1.bf16.xpose.msra.mxu0 0
        %966 = vmatprep.subr.bf16.mxu0 0
        %967 = vmatpush1.bf16.xpose.msra.mxu0 0
        %968 = vmatprep.subr.bf16.mxu0 0
        %969 = vmatpush1.bf16.xpose.msra.mxu0 0
        %970 = vmatprep.subr.bf16.mxu0 0
        %971 = vmatpush1.bf16.xpose.msra.mxu0 0
        %972 = vmatprep.subr.bf16.mxu0 0
        %973 = vmatpush1.bf16.xpose.msra.mxu0 0
        %974 = vmatprep.subr.bf16.mxu0 0
        %975 = vmatpush1.bf16.xpose.msra.mxu0 0
        %976 = vmatprep.subr.bf16.mxu0 0
        %977 = vmatpush1.bf16.xpose.msra.mxu0 0
        %978 = vmatprep.subr.bf16.mxu0 0
        %979 = vmatpush1.bf16.xpose.msra.mxu0 0
        %980 = vmatprep.subr.bf16.mxu0 0
        %981 = vmatpush1.bf16.xpose.msra.mxu0 0
        %982 = vmatprep.subr.bf16.mxu0 0
        %983 = vmatpush1.bf16.xpose.msra.mxu0 0
        %984 = vmatprep.subr.bf16.mxu0 0
        %985 = vmatpush1.bf16.xpose.msra.mxu0 0
        %986 = vmatprep.subr.bf16.mxu0 0
        %987 = vmatpush1.bf16.xpose.msra.mxu0 0
        %988 = vmatprep.subr.bf16.mxu0 0
        %989 = vmatpush1.bf16.xpose.msra.mxu0 0
        %990 = vmatprep.mubr.bf16.mxu0 0
        %991 = vmatmul.mubr.bf16.gmra.mrb[0].mxu0 %v956
        %v992 = vpop.f32.mrb[0].mxu0
        %v993 = vadd.f32 0.0, %v992
        %v994 = vpop.f32.mrb[0].mxu0
        %v995 = vpop.f32.mrb[0].mxu0
        %v996 = vpop.f32.mrb[0].mxu0
        %997 = vdwg.mxu0
        %v998 = vsel %vm501, %v993, -inf
        %999 = vmax.xlane.f32.xlu0 %v998
        %v1000 = vpop.xlane.xlu0 %999
        %v1001 = vsub.f32 %v993, %v1000
        %v1002 = vmul.f32 %v1001, 1.442695
        %v1003 = vpow.pop %v1002
        %v1004 = vsel %vm501, %v1003, 0.0
        %1005 = vadd.xlane.f32.xlu0 %v1004
        %v1006 = vpop.xlane.xlu0 %1005
        %v1007 = vrcp.pop %v1006
        %v1008 = vmul.f32 %v1003, %v1007
        %v1009 = vpack.c.bf16 %v1008, %v1008
        %v1011 = vsel %vm501, %v1009, 0
        %1013 = vmatprep.subr.bf16.mxu0 0
        %1014 = vmatpush1.bf16.msra.mxu0 %v565
        %1015 = vmatprep.subr.bf16.mxu0 0
        %1016 = vmatpush1.bf16.msra.mxu0 0
        %1017 = vmatprep.subr.bf16.mxu0 0
        %1018 = vmatpush1.bf16.msra.mxu0 0
        %1019 = vmatprep.subr.bf16.mxu0 0
        %1020 = vmatpush1.bf16.msra.mxu0 0
        %1021 = vmatprep.subr.bf16.mxu0 0
        %1022 = vmatpush1.bf16.msra.mxu0 0
        %1023 = vmatprep.subr.bf16.mxu0 0
        %1024 = vmatpush1.bf16.msra.mxu0 0
        %1025 = vmatprep.subr.bf16.mxu0 0
        %1026 = vmatpush1.bf16.msra.mxu0 0
        %1027 = vmatprep.subr.bf16.mxu0 0
        %1028 = vmatpush1.bf16.msra.mxu0 0
        %1029 = vmatprep.subr.bf16.mxu0 0
        %1030 = vmatpush1.bf16.msra.mxu0 0
        %1031 = vmatprep.subr.bf16.mxu0 0
        %1032 = vmatpush1.bf16.msra.mxu0 0
        %1033 = vmatprep.subr.bf16.mxu0 0
        %1034 = vmatpush1.bf16.msra.mxu0 0
        %1035 = vmatprep.subr.bf16.mxu0 0
        %1036 = vmatpush1.bf16.msra.mxu0 0
        %1037 = vmatprep.subr.bf16.mxu0 0
        %1038 = vmatpush1.bf16.msra.mxu0 0
        %1039 = vmatprep.subr.bf16.mxu0 0
        %1040 = vmatpush1.bf16.msra.mxu0 0
        %1041 = vmatprep.subr.bf16.mxu0 0
        %1042 = vmatpush1.bf16.msra.mxu0 0
        %1043 = vmatprep.subr.bf16.mxu0 0
        %1044 = vmatpush1.bf16.msra.mxu0 0
        %1045 = vmatprep.mubr.bf16.mxu0 0
        %1046 = vmatmul.mubr.bf16.gmra.mrb[0].mxu0 %v1011
        %v1047 = vpop.f32.mrb[0].mxu0
        %v1048 = vadd.f32 0.0, %v1047
        %v1049 = vpop.f32.mrb[0].mxu0
        %v1050 = vpop.f32.mrb[0].mxu0
        %v1051 = vpop.f32.mrb[0].mxu0
        %1052 = vdwg.mxu0
        %v1053 = vpack.c.bf16 %v1048, %v1048
        %v1054 = vld [vmem:[%s5 + $0xc] sm:$0xf]
        %v1056 = vsel %vm501, %v1053, 0
        %v1059 = vsel %vm563, %v1054, 0
        %1061 = vmatprep.subr.bf16.mxu0 0
        %1062 = vmatpush1.bf16.msra.mxu0 %v1059
        %1063 = vmatprep.subr.bf16.mxu0 0
        %1064 = vmatpush1.bf16.msra.mxu0 0
        %1065 = vmatprep.subr.bf16.mxu0 0
        %1066 = vmatpush1.bf16.msra.mxu0 0
        %1067 = vmatprep.subr.bf16.mxu0 0
        %1068 = vmatpush1.bf16.msra.mxu0 0
        %1069 = vmatprep.subr.bf16.mxu0 0
        %1070 = vmatpush1.bf16.msra.mxu0 0
        %1071 = vmatprep.subr.bf16.mxu0 0
        %1072 = vmatpush1.bf16.msra.mxu0 0
        %1073 = vmatprep.subr.bf16.mxu0 0
        %1074 = vmatpush1.bf16.msra.mxu0 0
        %1075 = vmatprep.subr.bf16.mxu0 0
        %1076 = vmatpush1.bf16.msra.mxu0 0
        %1077 = vmatprep.subr.bf16.mxu0 0
        %1078 = vmatpush1.bf16.msra.mxu0 0
        %1079 = vmatprep.subr.bf16.mxu0 0
        %1080 = vmatpush1.bf16.msra.mxu0 0
        %1081 = vmatprep.subr.bf16.mxu0 0
        %1082 = vmatpush1.bf16.msra.mxu0 0
        %1083 = vmatprep.subr.bf16.mxu0 0
        %1084 = vmatpush1.bf16.msra.mxu0 0
        %1085 = vmatprep.subr.bf16.mxu0 0
        %1086 = vmatpush1.bf16.msra.mxu0 0
        %1087 = vmatprep.subr.bf16.mxu0 0
        %1088 = vmatpush1.bf16.msra.mxu0 0
        %1089 = vmatprep.subr.bf16.mxu0 0
        %1090 = vmatpush1.bf16.msra.mxu0 0
        %1091 = vmatprep.subr.bf16.mxu0 0
        %1092 = vmatpush1.bf16.msra.mxu0 0
        %1093 = vmatprep.mubr.bf16.mxu0 0
        %1094 = vmatmul.mubr.bf16.gmra.mrb[0].mxu0 %v1056
        %v1095 = vpop.f32.mrb[0].mxu0
        %v1096 = vadd.f32 0.0, %v1095
        %v1097 = vpop.f32.mrb[0].mxu0
        %v1098 = vpop.f32.mrb[0].mxu0
        %v1099 = vpop.f32.mrb[0].mxu0
        %1100 = vdwg.mxu0
        %v1101 = vadd.f32 %v952, %v1096
        %1102 = vst.msk [vmem:[%s301] sm:$0xff] %vm453, %v1101
        %s1103 = sand.u32 %s183, 1
        %s1104 = scalar_lea.sflag [#allocation6], %s1103
        %s1105 = sand.u32 %s183, 1
        %s1106 = smul.addr %s1105, 8
        %s1107 = scalar_lea.vmem [#allocation7], %s1106
        // Predicated region
        $region53: #{tpu_custom_call.1} parent=43 // pred_check
          %p1108 = pneg %p193
        $region54: #{tpu_custom_call.1} parent=43 // pred_check_branch
          %1110 = sbr.rel (%p1108) target = $region56
        $region55: #{tpu_custom_call.1} parent=43 // pred_region
          %s1112 = ssub.s32 128, 128
          %1113 = vsyncadd %s1104, %s1112
          %s1114 = sadd.s32 %s28, %s27
          %s1115 = smul.addr %s1114, 128
          %s1116 = scalar_lea.hbm %s6, %s1115
          %s1118 = sshll.u32 %s1107, 4
          %s1119 = int_to_ptr.vmem [resolvable:$true] %s1118
          %1121 = dma.vmem_to_hbm [thread:$0]  %s1119, 128, %s1116, %s1104
        $region56: #{tpu_custom_call.1} parent=43 // pred_fallthru
          _
      $region44: #{tpu_custom_call.1} parent=5 // pred_fallthru
        _
      %p1122 = scmp.le.s32.totalorder 2, %s18
      // Predicated region
      $region57: #{tpu_custom_call.1} parent=5 // pred_check
        %p1123 = pneg %p1122
      $region58: #{tpu_custom_call.1} parent=5 // pred_check_branch
        %1125 = sbr.rel (%p1123) target = $region60
      $region59: #{tpu_custom_call.1} parent=5 // pred_region
        %s1126 = ssub.s32 %s18, 2
        // Predicated region
        $region61: #{tpu_custom_call.1} parent=59 // pred_check
          %p1127 = pneg %p199
        $region62: #{tpu_custom_call.1} parent=59 // pred_check_branch
          %1129 = sbr.rel (%p1127) target = $region64
        $region63: #{tpu_custom_call.1} parent=59 // pred_region
          %s1130 = sand.u32 %s184, 1
          %s1131 = scalar_lea.sflag [#allocation6], %s1130
          %s1132 = sand.u32 %s184, 1
          %s1133 = smul.addr %s1132, 8
          %s1134 = scalar_lea.vmem [#allocation7], %s1133
          %1135 = dma.done %s1131, 128
        $region64: #{tpu_custom_call.1} parent=59 // pred_fallthru
          _
      $region60: #{tpu_custom_call.1} parent=5 // pred_fallthru
        _
    $region6: #{tpu_custom_call.1} parent=1 // loop_footer
      %s22 = sadd.s32 1, %s18
    $region7: #{tpu_custom_call.1} parent=1 // loop_footer_branch
      %17 = sbr.rel target = $region3
    $region8: #{tpu_custom_call.1} parent=1 // loop_exit
      _
    %1136 = vsyncpa [#allocation5], 1
    %s1137 = scalar_lea.sflag [#allocation5], 1
    %1138 = vsyncpa %s1137, 1
    %1139 = vsyncpa [#allocation6], 1
    %s1140 = scalar_lea.sflag [#allocation6], 1
    %1141 = vsyncpa %s1140, 1

</llo_original>
